<compile_context>
chip_gen: v7x
topology: tpu7x:2x2x1
jax: 0.10.0
libtpu: 0.0.40
codegen_flags: <defaults>
</compile_context>

<pallas_src>
import jax
import jax.numpy as jnp
from jax.experimental import pallas as pl
from jax.experimental.pallas import tpu as pltpu

LANES = 128
MAX_TILE_ROWS = 8192                 # caps f32-widened per-tile intermediates at 4 MiB
VMEM_LIMIT_BYTES = 32 * 1024 * 1024  # >= default scoped VMEM on v6e/v7x, raises v5e's 16 MiB


def _round_up(x: int, m: int) -> int:
    return ((x + m - 1) // m) * m


def _tpu_kind() -> str:
    try:
        return jax.devices()[0].device_kind.lower()
    except Exception:
        return ""


def _make_rmse_partial_kernel(n_rows: int, tile_rows: int,
                              tiles_per_split: int, acc_rows: int):
    groups = tile_rows // acc_rows

    def kernel(pred_ref, target_ref, out_ref, acc_ref):
        s = pl.program_id(0)   # split (TensorCore) index
        i = pl.program_id(1)   # tile index within this split (reduction axis)

        @pl.when(i == 0)
        def _init():
            acc_ref[...] = jnp.zeros_like(acc_ref)

        row_start = (s * tiles_per_split + i) * tile_rows

        def accumulate(mask_rows: bool):
            # Elementwise diff/square in f32 on the VPU; HBM traffic stays at
            # the native input dtype.
            diff = (pred_ref[...].astype(jnp.float32)
                    - target_ref[...].astype(jnp.float32))
            sq = diff * diff
            if mask_rows:
                # Select (NOT multiply-by-mask): OOB rows of a partial block
                # read undefined VMEM that may hold Inf/NaN.
                row_ids = row_start + jax.lax.broadcasted_iota(
                    jnp.int32, (tile_rows, LANES), 0)
                sq = jnp.where(row_ids < n_rows, sq, 0.0)
            # Lane-wise partial accumulation into `acc_rows` independent vreg
            # chains; the cross-lane reduce is deferred to the wrapper.
            acc_ref[...] += jnp.sum(sq.reshape(groups, acc_rows, LANES), axis=0)

        full_tile = row_start + tile_rows <= n_rows

        # Steady state: full in-bounds tile, no masking work at all.
        @pl.when(full_tile)
        def _full():
            accumulate(False)

        # Boundary tile only: mask rows past the real array.
        @pl.when(jnp.logical_and(row_start < n_rows,
                                 jnp.logical_not(full_tile)))
        def _ragged():
            accumulate(True)

        # Tiles with row_start >= n_rows are clamped duplicates of the last
        # block (only possible on the 2-way v7x split); they skip compute.

        @pl.when(i == tiles_per_split - 1)
        def _finalize():
            out_ref[...] = acc_ref[...]

    return kernel


def rmse_loss(pred: jax.Array, target: jax.Array) -> jax.Array:
    assert pred.shape == target.shape, "pred/target shape mismatch"
    n = pred.size
    assert n > 0

    kind = _tpu_kind()
    is_v7 = ("v7" in kind) or ("7x" in kind)
    num_splits = 2 if is_v7 else 1                 # 2 TensorCores only on v7x
    block_bytes = (4 << 20) if is_v7 else (2 << 20)

    # Flatten in native dtype (no host f32 upcast).
    flat_pred = pred.reshape(-1)
    flat_target = target.reshape(-1)

    # Lane-divisible sizes reshape zero-copy; only ragged sizes pad the
    # <128-element tail (padded entries are 0 in BOTH tensors => diff == 0).
    rows = pl.cdiv(n, LANES)
    pad = rows * LANES - n
    if pad > 0:
        flat_pred = jnp.pad(flat_pred, (0, pad))
        flat_target = jnp.pad(flat_target, (0, pad))

    pred2d = flat_pred.reshape(rows, LANES)
    target2d = flat_target.reshape(rows, LANES)

    # Tile rows from a byte budget (so bf16 streams as many bytes per step as
    # f32), rounded to the dtype's sublane multiple, capped for VMEM safety.
    itemsize = jnp.dtype(pred.dtype).itemsize
    sub = max(8, 32 // itemsize)                   # f32: 8, bf16: 16, int8: 32
    budget_rows = min(block_bytes // (LANES * itemsize), MAX_TILE_ROWS)
    tile_rows = min(budget_rows, _round_up(rows, sub))
    tile_rows = _round_up(tile_rows, sub)

    # Wider accumulator (4 independent vreg chains) when the tile allows it.
    acc_rows = 32 if tile_rows % 32 == 0 else 8

    num_tiles = pl.cdiv(rows, tile_rows)
    tiles_per_split = pl.cdiv(num_tiles, num_splits)
    max_block = num_tiles - 1  # clamp so no DMA block starts fully off-array

    def in_index_map(s, i):
        return (jnp.minimum(s * tiles_per_split + i, max_block), 0)

    cost = pl.CostEstimate(
        flops=3 * n,               # sub + mul + accumulate-add per element
        transcendentals=0,
        bytes_accessed=2 * n * itemsize + num_splits * acc_rows * LANES * 4,
    )

    partials = pl.pallas_call(
        _make_rmse_partial_kernel(rows, tile_rows, tiles_per_split, acc_rows),
        out_shape=jax.ShapeDtypeStruct((num_splits * acc_rows, LANES), jnp.float32),
        grid_spec=pltpu.PrefetchScalarGridSpec(
            num_scalar_prefetch=0,
            grid=(num_splits, tiles_per_split),
            in_specs=[
                pl.BlockSpec((tile_rows, LANES), in_index_map),
                pl.BlockSpec((tile_rows, LANES), in_index_map),
            ],
            out_specs=pl.BlockSpec((acc_rows, LANES), lambda s, i: (s, 0)),
            scratch_shapes=[pltpu.VMEM((acc_rows, LANES), jnp.float32)],
        ),
        compiler_params=pltpu.CompilerParams(
            # Outer (split) axis is "parallel": shards across the 2 TCs on v7x,
            # size-1/no-op on single-TC chips. Reduction axis is "arbitrary".
            dimension_semantics=("parallel", "arbitrary"),
            vmem_limit_bytes=VMEM_LIMIT_BYTES,
        ),
        cost_estimate=cost,
    )(pred2d, target2d)

    # Tiny final combine: cross-lane sum of the per-split partials, divide by
    # the TRUE (unpadded) element count, sqrt — identical to torch.sqrt(mse).
    return jnp.sqrt(jnp.sum(partials) / jnp.float32(n))


if __name__ == "__main__":
    key = jax.random.PRNGKey(0)
    k1, k2, k3, k4, k5, k6, k7, k8 = jax.random.split(key, 8)

    # Main check: NCHW-like f32 input, lane-divisible size (zero-copy path).
    shape = (2, 4, 16, 16)
    pred = jax.random.normal(k1, shape, dtype=jnp.float32)
    target = jax.random.normal(k2, shape, dtype=jnp.float32)
    loss = jax.block_until_ready(rmse_loss(pred, target))
    ref = jnp.sqrt(jnp.mean((pred - target) ** 2))
    assert jnp.allclose(loss, ref, rtol=1e-6, atol=1e-6), (loss, ref)

    # Odd size: exercises the tail pad + boundary-tile row masking.
    p2 = jax.random.normal(k3, (7, 33), dtype=jnp.float32)
    t2 = jax.random.normal(k4, (7, 33), dtype=jnp.float32)
    loss2 = jax.block_until_ready(rmse_loss(p2, t2))
    ref2 = jnp.sqrt(jnp.mean((p2 - t2) ** 2))
    assert jnp.allclose(loss2, ref2, rtol=1e-6, atol=1e-6), (loss2, ref2)

    # bf16 inputs stream at native width; squared-diff accumulation is in f32.
    p3 = jax.random.normal(k5, (3, 50, 20), dtype=jnp.bfloat16)
    t3 = jax.random.normal(k6, (3, 50, 20), dtype=jnp.bfloat16)
    loss3 = jax.block_until_ready(rmse_loss(p3, t3))
    d3 = p3.astype(jnp.float32) - t3.astype(jnp.float32)
    ref3 = jnp.sqrt(jnp.mean(d3 * d3))
    assert jnp.allclose(loss3, ref3, rtol=1e-5, atol=1e-6), (loss3, ref3)

    # Larger ragged case: multiple grid tiles + full/ragged/accumulate paths.
    p4 = jax.random.normal(k7, (520, 2049), dtype=jnp.float32)
    t4 = jax.random.normal(k8, (520, 2049), dtype=jnp.float32)
    loss4 = jax.block_until_ready(rmse_loss(p4, t4))
    ref4 = jnp.sqrt(jnp.mean((p4 - t4) ** 2))
    assert jnp.allclose(loss4, ref4, rtol=1e-5, atol=1e-6), (loss4, ref4)

    print("KERNEL_OK")
</pallas_src>

<mosaic_0001>
module attributes {stable_mosaic.version = 11 : i64} {
  func.func @kernel(%arg0: i32, %arg1: i32, %arg2: memref<16x128xf32, #tpu.memory_space<vmem>>, %arg3: memref<16x128xf32, #tpu.memory_space<vmem>>, %arg4: memref<8x128xf32, #tpu.memory_space<vmem>>, %arg5: memref<8x128xf32, #tpu.memory_space<vmem>>) attributes {dimension_semantics = [#tpu.dimension_semantics<parallel>, #tpu.dimension_semantics<arbitrary>], iteration_bounds = array<i64: 1, 1>, scalar_prefetch = 0 : i64, scratch_operands = 1 : i64, tpu.core_type = #tpu.core_type<tc>, window_params = [{transform_indices = @transform_0, window_bounds = array<i64: 16, 128>}, {transform_indices = @transform_1, window_bounds = array<i64: 16, 128>}, {transform_indices = @transform_2, window_bounds = array<i64: 8, 128>}]} {
    %c0_i32 = arith.constant 0 : i32
    %0 = arith.cmpi eq, %arg1, %c0_i32 : i32
    %1 = arith.extui %0 : i1 to i32
    %c0_i32_0 = arith.constant 0 : i32
    %2 = arith.cmpi ne, %1, %c0_i32_0 : i32
    scf.if %2 {
      %cst = arith.constant 0.000000e+00 : f32
      %18 = vector.broadcast %cst : f32 to vector<8x128xf32>
      %c0 = arith.constant 0 : index
      %c0_8 = arith.constant 0 : index
      %19 = vector.load %arg5[%c0, %c0_8] : memref<8x128xf32, #tpu.memory_space<vmem>>, vector<8x128xf32>
      tpu.vector_store %arg5[%c0, %c0_8], %18 {strides = array<i32>} : memref<8x128xf32, #tpu.memory_space<vmem>>, vector<8x128xf32>,
    } else {
    }
    %c1_i32 = arith.constant 1 : i32
    %3 = arith.muli %arg0, %c1_i32 : i32
    %4 = arith.addi %3, %arg1 : i32
    %c16_i32 = arith.constant 16 : i32
    %5 = arith.muli %4, %c16_i32 : i32
    %c16_i32_1 = arith.constant 16 : i32
    %6 = arith.addi %5, %c16_i32_1 : i32
    %c16_i32_2 = arith.constant 16 : i32
    %7 = arith.cmpi sle, %6, %c16_i32_2 : i32
    %8 = arith.extui %7 : i1 to i32
    %c0_i32_3 = arith.constant 0 : i32
    %9 = arith.cmpi ne, %8, %c0_i32_3 : i32
    scf.if %9 {
      %c0 = arith.constant 0 : index
      %c0_8 = arith.constant 0 : index
      %18 = vector.load %arg2[%c0, %c0_8] : memref<16x128xf32, #tpu.memory_space<vmem>>, vector<16x128xf32>
      %c0_9 = arith.constant 0 : index
      %c0_10 = arith.constant 0 : index
      %19 = vector.load %arg3[%c0_9, %c0_10] : memref<16x128xf32, #tpu.memory_space<vmem>>, vector<16x128xf32>
      %20 = arith.subf %18, %19 : vector<16x128xf32>
      %21 = arith.mulf %20, %20 : vector<16x128xf32>
      %c0_11 = arith.constant 0 : index
      %c0_12 = arith.constant 0 : index
      %22 = vector.load %arg5[%c0_11, %c0_12] : memref<8x128xf32, #tpu.memory_space<vmem>>, vector<8x128xf32>
      %23 = vector.shape_cast %21 : vector<16x128xf32> to vector<2x8x128xf32>
      %cst = arith.constant dense<0.000000e+00> : vector<8x128xf32>
      %24 = vector.multi_reduction <add>, %23, %cst [0] : vector<2x8x128xf32> to vector<8x128xf32>
      %25 = arith.addf %22, %24 : vector<8x128xf32>
      %c0_13 = arith.constant 0 : index
      %c0_14 = arith.constant 0 : index
      %26 = vector.load %arg5[%c0_13, %c0_14] : memref<8x128xf32, #tpu.memory_space<vmem>>, vector<8x128xf32>
      tpu.vector_store %arg5[%c0_13, %c0_14], %25 {strides = array<i32>} : memref<8x128xf32, #tpu.memory_space<vmem>>, vector<8x128xf32>,
    } else {
    }
    %c16_i32_4 = arith.constant 16 : i32
    %10 = arith.cmpi slt, %5, %c16_i32_4 : i32
    %true = arith.constant true
    %11 = arith.xori %7, %true : i1
    %12 = arith.andi %10, %11 : i1
    %13 = arith.extui %12 : i1 to i32
    %c0_i32_5 = arith.constant 0 : i32
    %14 = arith.cmpi ne, %13, %c0_i32_5 : i32
    scf.if %14 {
      %c0 = arith.constant 0 : index
      %c0_8 = arith.constant 0 : index
      %18 = vector.load %arg2[%c0, %c0_8] : memref<16x128xf32, #tpu.memory_space<vmem>>, vector<16x128xf32>
      %c0_9 = arith.constant 0 : index
      %c0_10 = arith.constant 0 : index
      %19 = vector.load %arg3[%c0_9, %c0_10] : memref<16x128xf32, #tpu.memory_space<vmem>>, vector<16x128xf32>
      %20 = arith.subf %18, %19 : vector<16x128xf32>
      %21 = arith.mulf %20, %20 : vector<16x128xf32>
      %22 = tpu.iota {dimensions = array<i32: 0>} : vector<16x128xi32>
      %23 = vector.broadcast %5 : i32 to vector<16x128xi32>
      %24 = arith.addi %23, %22 : vector<16x128xi32>
      %c16_i32_11 = arith.constant 16 : i32
      %25 = vector.broadcast %c16_i32_11 : i32 to vector<16x128xi32>
      %26 = arith.cmpi slt, %24, %25 : vector<16x128xi32>
      %cst = arith.constant 0.000000e+00 : f32
      %27 = vector.broadcast %cst : f32 to vector<16x128xf32>
      %28 = arith.select %26, %21, %27 : vector<16x128xi1>, vector<16x128xf32>
      %c0_12 = arith.constant 0 : index
      %c0_13 = arith.constant 0 : index
      %29 = vector.load %arg5[%c0_12, %c0_13] : memref<8x128xf32, #tpu.memory_space<vmem>>, vector<8x128xf32>
      %30 = vector.shape_cast %28 : vector<16x128xf32> to vector<2x8x128xf32>
      %cst_14 = arith.constant dense<0.000000e+00> : vector<8x128xf32>
      %31 = vector.multi_reduction <add>, %30, %cst_14 [0] : vector<2x8x128xf32> to vector<8x128xf32>
      %32 = arith.addf %29, %31 : vector<8x128xf32>
      %c0_15 = arith.constant 0 : index
      %c0_16 = arith.constant 0 : index
      %33 = vector.load %arg5[%c0_15, %c0_16] : memref<8x128xf32, #tpu.memory_space<vmem>>, vector<8x128xf32>
      tpu.vector_store %arg5[%c0_15, %c0_16], %32 {strides = array<i32>} : memref<8x128xf32, #tpu.memory_space<vmem>>, vector<8x128xf32>,
    } else {
    }
    %c0_i32_6 = arith.constant 0 : i32
    %15 = arith.cmpi eq, %arg1, %c0_i32_6 : i32
    %16 = arith.extui %15 : i1 to i32
    %c0_i32_7 = arith.constant 0 : i32
    %17 = arith.cmpi ne, %16, %c0_i32_7 : i32
    scf.if %17 {
      %c0 = arith.constant 0 : index
      %c0_8 = arith.constant 0 : index
      %18 = vector.load %arg5[%c0, %c0_8] : memref<8x128xf32, #tpu.memory_space<vmem>>, vector<8x128xf32>
      %c0_9 = arith.constant 0 : index
      %c0_10 = arith.constant 0 : index
      %19 = vector.load %arg4[%c0_9, %c0_10] : memref<8x128xf32, #tpu.memory_space<vmem>>, vector<8x128xf32>
      tpu.vector_store %arg4[%c0_9, %c0_10], %18 {strides = array<i32>} : memref<8x128xf32, #tpu.memory_space<vmem>>, vector<8x128xf32>,
    } else {
    }
    return
  }
  func.func @transform_0(%arg0: i32, %arg1: i32) -> (i32, i32) {
    %c1_i32 = arith.constant 1 : i32
    %0 = arith.muli %arg0, %c1_i32 : i32
    %1 = arith.addi %0, %arg1 : i32
    %c0_i32 = arith.constant 0 : i32
    %2 = arith.minsi %1, %c0_i32 : i32
    %c0_i32_0 = arith.constant 0 : i32
    %c0_i32_1 = arith.constant 0 : i32
    return %2, %c0_i32_0 : i32, i32
  }
  func.func @transform_1(%arg0: i32, %arg1: i32) -> (i32, i32) {
    %c1_i32 = arith.constant 1 : i32
    %0 = arith.muli %arg0, %c1_i32 : i32
    %1 = arith.addi %0, %arg1 : i32
    %c0_i32 = arith.constant 0 : i32
    %2 = arith.minsi %1, %c0_i32 : i32
    %c0_i32_0 = arith.constant 0 : i32
    %c0_i32_1 = arith.constant 0 : i32
    return %2, %c0_i32_0 : i32, i32
  }
  func.func @transform_2(%arg0: i32, %arg1: i32) -> (i32, i32) {
    %c0_i32 = arith.constant 0 : i32
    %c0_i32_0 = arith.constant 0 : i32
    return %arg0, %c0_i32 : i32, i32
  }
}

</mosaic_0001>

<llo_original>
// kernel: tpu_custom_call.1
$region0: #{tpu_custom_call.1}
  #allocation0 [shape = 'u32[]', space=smem, size = 0x4, offset = 0x4, fixed_abs, tag = 'smem constant byte address 0x4 - core index']
  #allocation1 [shape = 'u32[144,128]{1,0:T(1,128)}', space=vmem, size = 0x12000, scoped, tag = 'internal scratch']
  #allocation2 [shape = 'f32[8,128]{1,0:T(8,128)}', space=vmem, size = 0x1000, scoped, tag = 'scratch operand']
  %s0 = inlined_call_operand.hbm [shape: f32[16,128], index: 0, kind: input, shape index: {}]
  %s1 = inlined_call_operand.hbm [shape: f32[16,128], index: 1, kind: input, shape index: {}]
  %s2 = inlined_call_operand.hbm [shape: f32[8,128], index: 2, kind: output, shape index: {}]
  %s3 = sld [smem:[#allocation0]]
  $region42: #{tpu_custom_call.1} parent=0
    _
  %s5 = ssub.s32 1, %s3
  %s6 = scalar_select 0, %s5, %s3
  $region1: #{tpu_custom_call.1} parent=0
    #allocation3 [shape = 'u8[8192]{0}', space=vmem, size = 0x2000, scoped, tag = 'input window, operand 0, single buffered']
    #allocation4 [shape = 's32[1]{0}', space=sflag, size = 0x4, scoped, tag = 'scoped memory for tpu_custom_call.1']
    #allocation5 [shape = 's32[1]{0}', space=sflag, size = 0x4, scoped, tag = 'scoped memory for tpu_custom_call.1']
    #allocation6 [shape = 'u8[8192]{0}', space=vmem, size = 0x2000, scoped, tag = 'input window, operand 1, single buffered']
    #allocation7 [shape = 's32[1]{0}', space=sflag, size = 0x4, scoped, tag = 'scoped memory for tpu_custom_call.1']
    #allocation8 [shape = 'u8[4096]{0}', space=vmem, size = 0x1000, scoped, tag = 'output window, operand 0, single buffered']
    %7 = vsyncpa [#allocation4], 0
    %8 = vsyncpa [#allocation7], 0
    %9 = vsyncpa [#allocation5], 0
    // Predicated region
    $region2: #{tpu_custom_call.1} parent=1 // pred_check
      _
    $region3: #{tpu_custom_call.1} parent=1 // pred_check_branch
      %11 = sbr.rel (0) target = $region5
    $region4: #{tpu_custom_call.1} parent=1 // pred_region
      %s12 = sadd.s32 0, 0
      %p13 = scmp.lt.s32.totalorder %s12, 0
      %s14 = scalar_select %p13, %s12, 0
      %s15 = smul.u32 2, %s14
      %s17 = ssub.s32 256, 256
      %18 = vsyncadd [#allocation4], %s17
      %s19 = smul.addr %s15, 128
      %s20 = scalar_lea.hbm %s0, %s19
      %s21 = sshll.u32 [#allocation3], 4
      %s22 = int_to_ptr.vmem [resolvable:$true] %s21
      %27 = dma.hbm_to_vmem [thread:$0]  %s20, 256, %s22, [#allocation4], 128, 128, 8
    $region5: #{tpu_custom_call.1} parent=1 // pred_fallthru
      _
    // Predicated region
    $region6: #{tpu_custom_call.1} parent=1 // pred_check
      _
    $region7: #{tpu_custom_call.1} parent=1 // pred_check_branch
      %29 = sbr.rel (0) target = $region9
    $region8: #{tpu_custom_call.1} parent=1 // pred_region
      %s30 = sadd.s32 0, 0
      %p31 = scmp.lt.s32.totalorder %s30, 0
      %s32 = scalar_select %p31, %s30, 0
      %s33 = smul.u32 2, %s32
      %s35 = ssub.s32 256, 256
      %36 = vsyncadd [#allocation7], %s35
      %s37 = smul.addr %s33, 128
      %s38 = scalar_lea.hbm %s1, %s37
      %s39 = sshll.u32 [#allocation6], 4
      %s40 = int_to_ptr.vmem [resolvable:$true] %s39
      %45 = dma.hbm_to_vmem [thread:$0]  %s38, 256, %s40, [#allocation7], 128, 128, 8
    $region9: #{tpu_custom_call.1} parent=1 // pred_fallthru
      _
    // Predicated region
    $region10: #{tpu_custom_call.1} parent=1 // pred_check
      _
    $region11: #{tpu_custom_call.1} parent=1 // pred_check_branch
      %47 = sbr.rel (0) target = $region13
    $region12: #{tpu_custom_call.1} parent=1 // pred_region
      %48 = dma.done [#allocation4], 256
    $region13: #{tpu_custom_call.1} parent=1 // pred_fallthru
      _
    // Predicated region
    $region14: #{tpu_custom_call.1} parent=1 // pred_check
      _
    $region15: #{tpu_custom_call.1} parent=1 // pred_check_branch
      %50 = sbr.rel (0) target = $region17
    $region16: #{tpu_custom_call.1} parent=1 // pred_region
      %51 = dma.done [#allocation7], 256
    $region17: #{tpu_custom_call.1} parent=1 // pred_fallthru
      _
    %s52 = sadd.s32 0, 0
    %p53 = scmp.lt.s32.totalorder %s52, 0
    %s54 = scalar_select %p53, %s52, 0
    %s55 = smul.u32 2, %s54
    %s56 = sadd.s32 0, 0
    %p57 = scmp.lt.s32.totalorder %s56, 0
    %s58 = scalar_select %p57, %s56, 0
    %s59 = smul.u32 2, %s58
    %p60 = scmp.eq.s32.totalorder 0, 0
    // Predicated region
    $region18: #{tpu_custom_call.1} parent=1 // pred_check
      %p61 = pneg %p60
    $region19: #{tpu_custom_call.1} parent=1 // pred_check_branch
      %63 = sbr.rel (%p61) target = $region21
    $region20: #{tpu_custom_call.1} parent=1 // pred_region
      %64 = vst [vmem:[#allocation2] sm:$0xff] 0.0
    $region21: #{tpu_custom_call.1} parent=1 // pred_fallthru
      _
    %s65 = sadd.s32 0, 0
    %s66 = smul.u32 %s65, 16
    %s67 = sadd.s32 %s66, 16
    %p68 = scmp.le.s32.totalorder %s67, 16
    // Predicated region
    $region22: #{tpu_custom_call.1} parent=1 // pred_check
      %p69 = pneg %p68
    $region23: #{tpu_custom_call.1} parent=1 // pred_check_branch
      %71 = sbr.rel (%p69) target = $region25
    $region24: #{tpu_custom_call.1} parent=1 // pred_region
      %v72 = vld [vmem:[#allocation3] sm:$0xff]
      %v73 = vld [vmem:[#allocation3 + $0x8] sm:$0xff]
      %v74 = vld [vmem:[#allocation6] sm:$0xff]
      %v75 = vld [vmem:[#allocation6 + $0x8] sm:$0xff]
      %v76 = vsub.f32 %v72, %v74
      %v77 = vsub.f32 %v73, %v75
      %v78 = vmul.f32 %v76, %v76
      %v79 = vmul.f32 %v77, %v77
      %v80 = vld [vmem:[#allocation2] sm:$0xff]
      %v81 = vadd.f32 %v78, %v79
      %v82 = vadd.f32 %v80, %v81
      %83 = vst [vmem:[#allocation2] sm:$0xff] %v82
    $region25: #{tpu_custom_call.1} parent=1 // pred_fallthru
      _
    %p84 = scmp.lt.s32.totalorder %s66, 16
    %p85 = scmp.gt.s32.totalorder %s67, 16
    %p86 = pnand %p84, %p85
    %p87 = pneg %p86
    // Predicated region
    $region26: #{tpu_custom_call.1} parent=1 // pred_check
      _
    $region27: #{tpu_custom_call.1} parent=1 // pred_check_branch
      %89 = sbr.rel (%p86) target = $region29
    $region28: #{tpu_custom_call.1} parent=1 // pred_region
      %v90 = vld [vmem:[#allocation3] sm:$0xff]
      %v91 = vld [vmem:[#allocation3 + $0x8] sm:$0xff]
      %v92 = vld [vmem:[#allocation6] sm:$0xff]
      %v93 = vld [vmem:[#allocation6 + $0x8] sm:$0xff]
      %v94 = vsub.f32 %v90, %v92
      %v95 = vsub.f32 %v91, %v93
      %v96 = vmul.f32 %v94, %v94
      %v97 = vmul.f32 %v95, %v95
      %v98 = vlaneseq
      %v99 = vshrl.u32 %v98, 7
      %v100 = vadd.s32 %v99, 8
      %v101 = vstv %s66
      %v102 = vadd.s32 %v101, %v99
      %v103 = vadd.s32 %v101, %v100
      %vm104 = vcmp.lt.s32.totalorder %v102, 16
      %vm105 = vcmp.lt.s32.totalorder %v103, 16
      %v106 = vsel %vm104, %v96, 0.0
      %v107 = vsel %vm105, %v97, 0.0
      %v108 = vld [vmem:[#allocation2] sm:$0xff]
      %v109 = vadd.f32 %v106, %v107
      %v110 = vadd.f32 %v108, %v109
      %111 = vst [vmem:[#allocation2] sm:$0xff] %v110
    $region29: #{tpu_custom_call.1} parent=1 // pred_fallthru
      _
    // Predicated region
    $region30: #{tpu_custom_call.1} parent=1 // pred_check
      %p112 = pneg %p60
    $region31: #{tpu_custom_call.1} parent=1 // pred_check_branch
      %114 = sbr.rel (%p112) target = $region33
    $region32: #{tpu_custom_call.1} parent=1 // pred_region
      %v115 = vld [vmem:[#allocation2] sm:$0xff]
      %116 = vst [vmem:[#allocation8] sm:$0xff] %v115
    $region33: #{tpu_custom_call.1} parent=1 // pred_fallthru
      _
    // Predicated region
    $region34: #{tpu_custom_call.1} parent=1 // pred_check
      _
    $region35: #{tpu_custom_call.1} parent=1 // pred_check_branch
      %118 = sbr.rel (0) target = $region37
    $region36: #{tpu_custom_call.1} parent=1 // pred_region
      %s120 = ssub.s32 128, 128
      %121 = vsyncadd [#allocation5], %s120
      %s123 = sshll.u32 [#allocation8], 4
      %s124 = int_to_ptr.vmem [resolvable:$true] %s123
      %126 = dma.vmem_to_hbm [thread:$0]  %s124, 128, %s2, [#allocation5]
    $region37: #{tpu_custom_call.1} parent=1 // pred_fallthru
      _
    // Predicated region
    $region38: #{tpu_custom_call.1} parent=1 // pred_check
      _
    $region39: #{tpu_custom_call.1} parent=1 // pred_check_branch
      %128 = sbr.rel (0) target = $region41
    $region40: #{tpu_custom_call.1} parent=1 // pred_region
      %129 = dma.done [#allocation5], 128
    $region41: #{tpu_custom_call.1} parent=1 // pred_fallthru
      _
    %130 = vsyncpa [#allocation4], 1
    %131 = vsyncpa [#allocation7], 1
    %132 = vsyncpa [#allocation5], 1

</llo_original>
